<compile_context>
chip_gen: v7x
topology: tpu7x:2x2x1
jax: 0.10.0
libtpu: 0.0.40
codegen_flags: <defaults>
</compile_context>

<pallas_src>
import jax
import jax.numpy as jnp
from jax.experimental import pallas as pl
from jax.experimental.pallas import tpu as pltpu


_IN_CH = 5                      # 4 keypoint attributes + score
_LANE = 128                     # lane width / position-tile granularity
_STEP_OVERHEAD_COLS = 3         # ~0.35us grid-step overhead, in 128-column units
_VMEM_BUDGET = 40 * (1 << 20)   # budget used when capping the tile size
_VMEM_LIMIT = 48 * (1 << 20)    # explicit scoped-VMEM limit (< v7x 64 MiB physical)


def _round_up(x, m):
    return (x + m - 1) // m * m


def _make_encoder_kernel(n_hidden):
    """Fused MLP over a channels-first [C, tile] slab.

    Ref order: x, [w_folded, c_folded] * n_hidden, w_last, b_last, out.
    Weights are pre-transposed to [c_out, c_in]; biases/shifts are [c_out, 1].
    """

    def kernel(*refs):
        x_ref = refs[0]
        o_ref = refs[-1]
        params = refs[1:-1]

        h = x_ref[...]                                    # [5, tile], MXU dtype
        idx = 0
        for _ in range(n_hidden):
            w, c = params[idx], params[idx + 1]
            idx += 2
            wv = w[...]
            # Conv1d(k=1) + bias + eval-BN folded:  h <- relu(W' @ h + c')
            acc = jnp.dot(wv, h.astype(wv.dtype),
                          preferred_element_type=jnp.float32)
            h = jnp.maximum(acc + c[...], 0.0)            # c broadcasts over lanes
        w, c = params[idx], params[idx + 1]
        wv = w[...]
        out = jnp.dot(wv, h.astype(wv.dtype),
                      preferred_element_type=jnp.float32) + c[...]
        o_ref[...] = out.astype(o_ref.dtype)

    return kernel


def _fold_params(params, mxu_dtype):
    """Transpose weights to [c_out, c_in] and fold conv bias + eval-mode BN
    into (weight, per-channel shift).  Weights are cast to the MXU dtype once;
    shifts stay f32 (elementwise math runs in f32)."""
    flat = []
    n_layers = len(params)
    for li, layer in enumerate(params):
        w = layer["w"]                                    # [c_in, c_out] f32
        b = layer["b"].reshape(-1)                        # [c_out]
        if li < n_layers - 1:                             # hidden layer: fold BN
            scale = layer["bn_scale"].reshape(-1)
            shift = layer["bn_shift"].reshape(-1)
            w = w * scale[None, :]
            b = b * scale + shift
        flat.append(jnp.transpose(w).astype(mxu_dtype))   # [c_out, c_in]
        flat.append(b[:, None].astype(jnp.float32))       # [c_out, 1]
    return flat


def _select_tile(n, cap_cols, bytes_per_col):
    """Pick a lane-dense position tile (multiple of 128).

    N is padded to a multiple of 128 only; among tiles <= cap we minimize
    (padded columns of work) + (per-grid-step overhead), preferring larger
    tiles on ties, so big tiles are used without round_up(N, tile) overshoot.
    """
    n128 = _round_up(max(n, 1), _LANE)
    vmem_cap = max(_LANE, (_VMEM_BUDGET // max(bytes_per_col, 1)) // _LANE * _LANE)
    cap = max(_LANE, min((cap_cols // _LANE) * _LANE, n128, vmem_cap))
    best_cost, best_t = None, _LANE
    for t in range(_LANE, cap + 1, _LANE):
        steps = -(-n128 // t)
        cost = (steps * t) // _LANE + _STEP_OVERHEAD_COLS * steps
        if best_cost is None or cost < best_cost or (cost == best_cost and t > best_t):
            best_cost, best_t = cost, t
    return best_t


def keypoint_encoder_forward(kpts, scores, params, *, tile_n=2048,
                             mxu_dtype=jnp.bfloat16, out_dtype=jnp.float32,
                             trim_output=True):
    """kpts: [B, N, 4] f32, scores: [B, N] f32.

    params: list of per-layer dicts (see init_params).
    Returns [B, feature_dim, N] (PyTorch Conv1d NCL layout) in out_dtype.
    With trim_output=False the 128-aligned padded output [B, F, n_pad] is
    returned (padded columns are junk) and the post-kernel slice copy is
    skipped.
    """
    B, N, K = kpts.shape
    assert K == 4 and scores.shape == (B, N)
    n_hidden = len(params) - 1
    feature_dim = params[-1]["w"].shape[1]
    channels = [_IN_CH] + [p["w"].shape[1] for p in params]

    in_bytes = jnp.dtype(mxu_dtype).itemsize
    out_bytes = jnp.dtype(out_dtype).itemsize
    cmax = max(channels)
    # Per-position VMEM cost: double-buffered input + output blocks plus a few
    # live f32 activation slabs.
    bytes_per_col = (2 * _IN_CH * in_bytes
                     + 2 * feature_dim * out_bytes
                     + 3 * cmax * 4)

    cap = int(tile_n)
    if B == 1:
        # v7x has 2 TensorCores sharding the 'parallel' grid axes; with a
        # single batch step make sure there are >= 2 position tiles.
        cap = min(cap, max(_LANE, (_round_up(N, _LANE) // 2) // _LANE * _LANE))
    tile = _select_tile(N, cap, bytes_per_col)
    n_pad = _round_up(_round_up(N, _LANE), tile)

    # Channels-first slab [B, 5, n_pad], stored directly in the MXU dtype.
    x = jnp.concatenate(
        [jnp.transpose(kpts, (0, 2, 1)), scores[:, None, :]],
        axis=1).astype(mxu_dtype)
    if n_pad != N:
        x = jnp.pad(x, ((0, 0), (0, 0), (0, n_pad - N)))

    flat_params = _fold_params(params, mxu_dtype)
    grid = (B, n_pad // tile)

    x_spec = pl.BlockSpec((None, _IN_CH, tile), lambda b, j: (b, 0, j))
    # Tiny parameters: one full-array block each, constant index_map
    # (resident across the whole grid).
    param_specs = [pl.BlockSpec(p.shape, lambda b, j: (0, 0))
                   for p in flat_params]
    out_spec = pl.BlockSpec((None, feature_dim, tile), lambda b, j: (b, 0, j))

    out = pl.pallas_call(
        _make_encoder_kernel(n_hidden),
        out_shape=jax.ShapeDtypeStruct((B, feature_dim, n_pad), out_dtype),
        grid_spec=pltpu.PrefetchScalarGridSpec(
            num_scalar_prefetch=0,
            grid=grid,
            in_specs=[x_spec] + param_specs,
            out_specs=out_spec,
        ),
        compiler_params=pltpu.CompilerParams(
            dimension_semantics=("parallel", "parallel"),
            vmem_limit_bytes=_VMEM_LIMIT,
        ),
    )(x, *flat_params)

    if trim_output and n_pad != N:
        out = out[:, :, :N]
    return out


def init_params(key, feature_dim, layers):
    """Deterministic synthetic parameters matching MLP([5] + layers + [feature_dim])."""
    channels = [5] + list(layers) + [feature_dim]
    params = []
    for i in range(1, len(channels)):
        cin, cout = channels[i - 1], channels[i]
        key, kw, kb, kg, kbeta, km, kv = jax.random.split(key, 7)
        w = jax.random.normal(kw, (cin, cout), jnp.float32) * 0.1
        is_last = i == len(channels) - 1
        if is_last:
            # nn.init.constant_(self.encoder[-1].bias, 0.0)
            b = jnp.zeros((1, cout), jnp.float32)
            params.append({"w": w, "b": b})
        else:
            b = jax.random.normal(kb, (1, cout), jnp.float32) * 0.1
            gamma = 1.0 + 0.1 * jax.random.normal(kg, (1, cout), jnp.float32)
            beta = 0.1 * jax.random.normal(kbeta, (1, cout), jnp.float32)
            running_mean = 0.1 * jax.random.normal(km, (1, cout), jnp.float32)
            running_var = 1.0 + 0.1 * jax.random.uniform(kv, (1, cout), jnp.float32)
            eps = 1e-5
            scale = gamma / jnp.sqrt(running_var + eps)
            shift = beta - running_mean * scale
            params.append({"w": w, "b": b, "bn_scale": scale, "bn_shift": shift})
    return params


def reference_forward(kpts, scores, params):
    """Plain-JAX reference (same eval-mode BN semantics) for a sanity check."""
    B, N, _ = kpts.shape
    h = jnp.concatenate([kpts, scores[..., None]], axis=-1).reshape(B * N, 5)
    for layer in params[:-1]:
        h = h @ layer["w"] + layer["b"]
        h = jnp.maximum(h * layer["bn_scale"] + layer["bn_shift"], 0.0)
    h = h @ params[-1]["w"] + params[-1]["b"]
    return h.reshape(B, N, -1).transpose(0, 2, 1)


if __name__ == "__main__":
    B, N = 2, 200                # N deliberately not 128-aligned (tests padding)
    feature_dim = 64
    layers = [32, 64]

    key = jax.random.PRNGKey(0)
    k_par, k_kpts, k_scores = jax.random.split(key, 3)

    params = init_params(k_par, feature_dim, layers)
    kpts = jax.random.normal(k_kpts, (B, N, 4), jnp.float32)
    scores = jax.random.uniform(k_scores, (B, N), jnp.float32)

    ref = reference_forward(kpts, scores, params)

    # f32 MXU operands: tight check vs reference.
    out_f32 = keypoint_encoder_forward(kpts, scores, params,
                                       mxu_dtype=jnp.float32)
    out_f32 = jax.block_until_ready(out_f32)
    assert out_f32.shape == (B, feature_dim, N), out_f32.shape
    assert jnp.allclose(out_f32, ref, atol=1e-4, rtol=1e-4), "f32 mismatch vs reference"

    # Default path: bf16 MXU operands (native MXU rate), f32 accumulation.
    out_bf16 = keypoint_encoder_forward(kpts, scores, params)
    out_bf16 = jax.block_until_ready(out_bf16)
    assert out_bf16.shape == (B, feature_dim, N), out_bf16.shape
    assert jnp.allclose(out_bf16, ref, atol=5e-2, rtol=5e-2), "bf16 mismatch vs reference"

    # B == 1 path: tile is capped so >= 2 position tiles exist (v7x 2-TC case).
    kpts1, scores1 = kpts[:1, :150], scores[:1, :150]
    ref1 = reference_forward(kpts1, scores1, params)
    out1 = keypoint_encoder_forward(kpts1, scores1, params)
    out1 = jax.block_until_ready(out1)
    assert out1.shape == (1, feature_dim, 150), out1.shape
    assert jnp.allclose(out1, ref1, atol=5e-2, rtol=5e-2), "B=1 mismatch vs reference"

    print("KERNEL_OK")
</pallas_src>

<mosaic_0001>
module attributes {stable_mosaic.version = 11 : i64} {
  func.func @kernel(%arg0: i32, %arg1: i32, %arg2: memref<1x5x256xf32, #tpu.memory_space<vmem>>, %arg3: memref<32x5xf32, #tpu.memory_space<vmem>>, %arg4: memref<32x1xf32, #tpu.memory_space<vmem>>, %arg5: memref<64x32xf32, #tpu.memory_space<vmem>>, %arg6: memref<64x1xf32, #tpu.memory_space<vmem>>, %arg7: memref<64x64xf32, #tpu.memory_space<vmem>>, %arg8: memref<64x1xf32, #tpu.memory_space<vmem>>, %arg9: memref<1x64x256xf32, #tpu.memory_space<vmem>>) attributes {dimension_semantics = [#tpu.dimension_semantics<parallel>, #tpu.dimension_semantics<parallel>], iteration_bounds = array<i64: 2, 1>, scalar_prefetch = 0 : i64, scratch_operands = 0 : i64, tpu.core_type = #tpu.core_type<tc>, window_params = [{transform_indices = @transform_0, window_bounds = array<i64: 1, 5, 256>}, {pipeline_mode = #tpu.pipeline_mode<synchronous>, transform_indices = @transform_1, window_bounds = array<i64: 32, 5>}, {pipeline_mode = #tpu.pipeline_mode<synchronous>, transform_indices = @transform_2, window_bounds = array<i64: 32, 1>}, {pipeline_mode = #tpu.pipeline_mode<synchronous>, transform_indices = @transform_3, window_bounds = array<i64: 64, 32>}, {pipeline_mode = #tpu.pipeline_mode<synchronous>, transform_indices = @transform_4, window_bounds = array<i64: 64, 1>}, {pipeline_mode = #tpu.pipeline_mode<synchronous>, transform_indices = @transform_5, window_bounds = array<i64: 64, 64>}, {pipeline_mode = #tpu.pipeline_mode<synchronous>, transform_indices = @transform_6, window_bounds = array<i64: 64, 1>}, {transform_indices = @transform_7, window_bounds = array<i64: 1, 64, 256>}]} {
    %c0 = arith.constant 0 : index
    %c0_0 = arith.constant 0 : index
    %c0_1 = arith.constant 0 : index
    %0 = vector.load %arg2[%c0, %c0_0, %c0_1] : memref<1x5x256xf32, #tpu.memory_space<vmem>>, vector<1x5x256xf32>
    %1 = vector.shape_cast %0 : vector<1x5x256xf32> to vector<5x256xf32>
    %c0_2 = arith.constant 0 : index
    %c0_3 = arith.constant 0 : index
    %2 = vector.load %arg3[%c0_2, %c0_3] : memref<32x5xf32, #tpu.memory_space<vmem>>, vector<32x5xf32>
    %cst = arith.constant dense<0.000000e+00> : vector<32x256xf32>
    %3 = tpu.matmul %2, %1, %cst {dimension_numbers = #tpu.dot_dimension_numbers<[1], [0], [0], [1], [0, 0, 1, 1], [], []>} : vector<32x5xf32>, vector<5x256xf32>, vector<32x256xf32> -> vector<32x256xf32>
    %c0_4 = arith.constant 0 : index
    %c0_5 = arith.constant 0 : index
    %4 = vector.load %arg4[%c0_4, %c0_5] : memref<32x1xf32, #tpu.memory_space<vmem>>, vector<32x1xf32>
    %5 = vector.broadcast %4 : vector<32x1xf32> to vector<32x256xf32>
    %6 = arith.addf %3, %5 : vector<32x256xf32>
    %cst_6 = arith.constant 0.000000e+00 : f32
    %7 = vector.broadcast %cst_6 : f32 to vector<32x256xf32>
    %8 = arith.maximumf %6, %7 : vector<32x256xf32>
    %c0_7 = arith.constant 0 : index
    %c0_8 = arith.constant 0 : index
    %9 = vector.load %arg5[%c0_7, %c0_8] : memref<64x32xf32, #tpu.memory_space<vmem>>, vector<64x32xf32>
    %cst_9 = arith.constant dense<0.000000e+00> : vector<64x256xf32>
    %10 = tpu.matmul %9, %8, %cst_9 {dimension_numbers = #tpu.dot_dimension_numbers<[1], [0], [0], [1], [0, 0, 1, 1], [], []>} : vector<64x32xf32>, vector<32x256xf32>, vector<64x256xf32> -> vector<64x256xf32>
    %c0_10 = arith.constant 0 : index
    %c0_11 = arith.constant 0 : index
    %11 = vector.load %arg6[%c0_10, %c0_11] : memref<64x1xf32, #tpu.memory_space<vmem>>, vector<64x1xf32>
    %12 = vector.broadcast %11 : vector<64x1xf32> to vector<64x256xf32>
    %13 = arith.addf %10, %12 : vector<64x256xf32>
    %cst_12 = arith.constant 0.000000e+00 : f32
    %14 = vector.broadcast %cst_12 : f32 to vector<64x256xf32>
    %15 = arith.maximumf %13, %14 : vector<64x256xf32>
    %c0_13 = arith.constant 0 : index
    %c0_14 = arith.constant 0 : index
    %16 = vector.load %arg7[%c0_13, %c0_14] : memref<64x64xf32, #tpu.memory_space<vmem>>, vector<64x64xf32>
    %cst_15 = arith.constant dense<0.000000e+00> : vector<64x256xf32>
    %17 = tpu.matmul %16, %15, %cst_15 {dimension_numbers = #tpu.dot_dimension_numbers<[1], [0], [0], [1], [0, 0, 1, 1], [], []>} : vector<64x64xf32>, vector<64x256xf32>, vector<64x256xf32> -> vector<64x256xf32>
    %c0_16 = arith.constant 0 : index
    %c0_17 = arith.constant 0 : index
    %18 = vector.load %arg8[%c0_16, %c0_17] : memref<64x1xf32, #tpu.memory_space<vmem>>, vector<64x1xf32>
    %19 = vector.broadcast %18 : vector<64x1xf32> to vector<64x256xf32>
    %20 = arith.addf %17, %19 : vector<64x256xf32>
    %c0_18 = arith.constant 0 : index
    %c0_19 = arith.constant 0 : index
    %c0_20 = arith.constant 0 : index
    %21 = vector.load %arg9[%c0_18, %c0_19, %c0_20] : memref<1x64x256xf32, #tpu.memory_space<vmem>>, vector<1x64x256xf32>
    %22 = vector.shape_cast %21 : vector<1x64x256xf32> to vector<64x256xf32>
    %23 = vector.shape_cast %20 : vector<64x256xf32> to vector<1x64x256xf32>
    tpu.vector_store %arg9[%c0_18, %c0_19, %c0_20], %23 {strides = array<i32>} : memref<1x64x256xf32, #tpu.memory_space<vmem>>, vector<1x64x256xf32>,
    return
  }
  func.func @transform_0(%arg0: i32, %arg1: i32) -> (i32, i32, i32) {
    %c0_i32 = arith.constant 0 : i32
    %c0_i32_0 = arith.constant 0 : i32
    return %arg0, %c0_i32, %arg1 : i32, i32, i32
  }
  func.func @transform_1(%arg0: i32, %arg1: i32) -> (i32, i32) {
    %c0_i32 = arith.constant 0 : i32
    %c0_i32_0 = arith.constant 0 : i32
    %c0_i32_1 = arith.constant 0 : i32
    return %c0_i32, %c0_i32_0 : i32, i32
  }
  func.func @transform_2(%arg0: i32, %arg1: i32) -> (i32, i32) {
    %c0_i32 = arith.constant 0 : i32
    %c0_i32_0 = arith.constant 0 : i32
    %c0_i32_1 = arith.constant 0 : i32
    return %c0_i32, %c0_i32_0 : i32, i32
  }
  func.func @transform_3(%arg0: i32, %arg1: i32) -> (i32, i32) {
    %c0_i32 = arith.constant 0 : i32
    %c0_i32_0 = arith.constant 0 : i32
    %c0_i32_1 = arith.constant 0 : i32
    return %c0_i32, %c0_i32_0 : i32, i32
  }
  func.func @transform_4(%arg0: i32, %arg1: i32) -> (i32, i32) {
    %c0_i32 = arith.constant 0 : i32
    %c0_i32_0 = arith.constant 0 : i32
    %c0_i32_1 = arith.constant 0 : i32
    return %c0_i32, %c0_i32_0 : i32, i32
  }
  func.func @transform_5(%arg0: i32, %arg1: i32) -> (i32, i32) {
    %c0_i32 = arith.constant 0 : i32
    %c0_i32_0 = arith.constant 0 : i32
    %c0_i32_1 = arith.constant 0 : i32
    return %c0_i32, %c0_i32_0 : i32, i32
  }
  func.func @transform_6(%arg0: i32, %arg1: i32) -> (i32, i32) {
    %c0_i32 = arith.constant 0 : i32
    %c0_i32_0 = arith.constant 0 : i32
    %c0_i32_1 = arith.constant 0 : i32
    return %c0_i32, %c0_i32_0 : i32, i32
  }
  func.func @transform_7(%arg0: i32, %arg1: i32) -> (i32, i32, i32) {
    %c0_i32 = arith.constant 0 : i32
    %c0_i32_0 = arith.constant 0 : i32
    return %arg0, %c0_i32, %arg1 : i32, i32, i32
  }
}

</mosaic_0001>

<llo_original>
// kernel: tpu_custom_call.1
$region0: #{tpu_custom_call.1}
  #allocation0 [shape = 'u32[]', space=smem, size = 0x4, offset = 0x4, fixed_abs, tag = 'smem constant byte address 0x4 - core index']
  #allocation1 [shape = 'u32[144,128]{1,0:T(1,128)}', space=vmem, size = 0x12000, scoped, tag = 'internal scratch']
  %s0 = inlined_call_operand.vmem [shape: f32[2,5,256], index: 0, kind: input, shape index: {}]
  %s1 = inlined_call_operand.vmem [shape: f32[32,5], index: 1, kind: input, shape index: {}]
  %s2 = inlined_call_operand.vmem [shape: f32[32,1], index: 2, kind: input, shape index: {}]
  %s3 = inlined_call_operand.vmem [shape: f32[64,32], index: 3, kind: input, shape index: {}]
  %s4 = inlined_call_operand.vmem [shape: f32[64,1], index: 4, kind: input, shape index: {}]
  %s5 = inlined_call_operand.vmem [shape: f32[64,64], index: 5, kind: input, shape index: {}]
  %s6 = inlined_call_operand.vmem [shape: f32[64,1], index: 6, kind: input, shape index: {}]
  %s7 = inlined_call_operand.hbm [shape: f32[2,64,256], index: 7, kind: output, shape index: {}]
  %s8 = sld [smem:[#allocation0]]
  $region61: #{tpu_custom_call.1} parent=0
    _
  %s10 = ssub.s32 1, %s8
  %s11 = scalar_select 0, %s10, %s8
  $region1: #{tpu_custom_call.1} parent=0
    #allocation2 [shape = 'u8[131072]{0}', space=vmem, size = 0x20000, scoped, tag = 'output window, operand 0']
    #allocation3 [shape = 's32[2]{0}', space=sflag, size = 0x8, scoped, tag = 'scoped memory for tpu_custom_call.1']
    %12 = vsyncpa [#allocation3], 0
    %s13 = scalar_lea.sflag [#allocation3], 1
    %14 = vsyncpa %s13, 0
    loop: start=0, step=1, limit=4
    $region2: #{tpu_custom_call.1} parent=1 // loop_pre_header
      _
    $region3: #{tpu_custom_call.1} parent=1 // loop_header
      %s16 = sphi 0, %s20
      %p17 = scmp.ge.s32.totalorder %s16, 4
      %s23 = sphi 0, %s35
      %s24 = sphi 0, %s31
      %s25 = sphi 0, %s23
      %s26 = sphi 0, %s24
      %s27 = sphi 0, %s25
      %s28 = sphi 0, %s26
      %s40 = sphi 0, %s42
      %s43 = sphi 0, %s40
      %s44 = sphi 0, %s43
      %s60 = sphi 0, %s44
      %s64 = sphi 0, %s64
      %s66 = sphi 0, %s64
      %s67 = sphi 0, %s66
      %s81 = sphi 0, %s67
      %s85 = sphi 0, %s85
      %s87 = sphi 0, %s85
      %s88 = sphi 0, %s87
      %s102 = sphi 0, %s88
      %s106 = sphi 0, %s106
      %s108 = sphi 0, %s106
      %s109 = sphi 0, %s108
      %s123 = sphi 0, %s109
      %s127 = sphi 0, %s127
      %s129 = sphi 0, %s127
      %s130 = sphi 0, %s129
      %s144 = sphi 0, %s130
      %s148 = sphi 0, %s148
      %s150 = sphi 0, %s148
      %s151 = sphi 0, %s150
      %s165 = sphi 0, %s151
      %s169 = sphi 0, %s169
      %s171 = sphi 0, %s169
      %s172 = sphi 0, %s171
      %s186 = sphi 0, %s172
      %s194 = sphi 0, %s196
      %s197 = sphi 0, %s194
      %s198 = sphi 0, %s197
      %s214 = sphi 0, %s198
    $region4: #{tpu_custom_call.1} parent=1 // loop_header_branch
      %19 = sbr.rel (%p17) target = $region8
    $region5: #{tpu_custom_call.1} parent=1 // loop_body
      %s21 = ssub.s32 %s16, 1
      %s22 = ssub.s32 %s16, 2
      %s29 = sadd.s32 1, %s24
      %p30 = scmp.ge.s32.totalorder %s29, 1
      %s31 = scalar_select %p30, 0, %s29
      %s32 = sadd.s32 1, %s23
      %s33 = scalar_select %p30, %s32, %s23
      %p34 = scmp.ge.s32.totalorder %s33, 2
      %s35 = scalar_select %p34, 0, %s33
      %s36 = ssub.s32 %s23, %s35
      %s37 = ssub.s32 %s24, %s31
      %s38 = sor.u32 %s36, %s37
      %p39 = scmp.eq.s32.totalorder %s38, 0
      %s41 = sadd.s32 %s40, 1
      %s42 = scalar_select %p39, %s40, %s41
      %p45 = pneg %p39
      %p46 = scmp.eq.s32.totalorder %s16, 1
      %p47 = por %p45, %p46
      %p48 = scmp.ne.s32.totalorder %s40, %s43
      %p49 = scmp.eq.s32.totalorder %s16, 0
      %p50 = por %p48, %p49
      %p51 = scmp.ne.s32.totalorder %s40, %s43
      %p52 = scmp.eq.s32.totalorder %s21, 1
      %p53 = por %p51, %p52
      %p54 = scmp.ne.s32.totalorder %s43, %s44
      %p55 = scmp.eq.s32.totalorder %s21, 0
      %p56 = por %p54, %p55
      %p57 = scmp.ne.s32.totalorder %s43, %s44
      %p58 = scmp.eq.s32.totalorder %s22, 1
      %p59 = por %p57, %p58
      %p61 = scmp.ne.s32.totalorder %s44, %s60
      %p62 = scmp.eq.s32.totalorder %s22, 0
      %p63 = por %p61, %p62
      %s65 = sadd.s32 %s64, 1
      %p68 = scmp.eq.s32.totalorder %s16, 1
      %p69 = scmp.ne.s32.totalorder %s64, %s66
      %p70 = scmp.eq.s32.totalorder %s16, 0
      %p71 = por %p69, %p70
      %p72 = scmp.ne.s32.totalorder %s64, %s66
      %p73 = scmp.eq.s32.totalorder %s21, 1
      %p74 = por %p72, %p73
      %p75 = scmp.ne.s32.totalorder %s66, %s67
      %p76 = scmp.eq.s32.totalorder %s21, 0
      %p77 = por %p75, %p76
      %p78 = scmp.ne.s32.totalorder %s66, %s67
      %p79 = scmp.eq.s32.totalorder %s22, 1
      %p80 = por %p78, %p79
      %p82 = scmp.ne.s32.totalorder %s67, %s81
      %p83 = scmp.eq.s32.totalorder %s22, 0
      %p84 = por %p82, %p83
      %s86 = sadd.s32 %s85, 1
      %p89 = scmp.eq.s32.totalorder %s16, 1
      %p90 = scmp.ne.s32.totalorder %s85, %s87
      %p91 = scmp.eq.s32.totalorder %s16, 0
      %p92 = por %p90, %p91
      %p93 = scmp.ne.s32.totalorder %s85, %s87
      %p94 = scmp.eq.s32.totalorder %s21, 1
      %p95 = por %p93, %p94
      %p96 = scmp.ne.s32.totalorder %s87, %s88
      %p97 = scmp.eq.s32.totalorder %s21, 0
      %p98 = por %p96, %p97
      %p99 = scmp.ne.s32.totalorder %s87, %s88
      %p100 = scmp.eq.s32.totalorder %s22, 1
      %p101 = por %p99, %p100
      %p103 = scmp.ne.s32.totalorder %s88, %s102
      %p104 = scmp.eq.s32.totalorder %s22, 0
      %p105 = por %p103, %p104
      %s107 = sadd.s32 %s106, 1
      %p110 = scmp.eq.s32.totalorder %s16, 1
      %p111 = scmp.ne.s32.totalorder %s106, %s108
      %p112 = scmp.eq.s32.totalorder %s16, 0
      %p113 = por %p111, %p112
      %p114 = scmp.ne.s32.totalorder %s106, %s108
      %p115 = scmp.eq.s32.totalorder %s21, 1
      %p116 = por %p114, %p115
      %p117 = scmp.ne.s32.totalorder %s108, %s109
      %p118 = scmp.eq.s32.totalorder %s21, 0
      %p119 = por %p117, %p118
      %p120 = scmp.ne.s32.totalorder %s108, %s109
      %p121 = scmp.eq.s32.totalorder %s22, 1
      %p122 = por %p120, %p121
      %p124 = scmp.ne.s32.totalorder %s109, %s123
      %p125 = scmp.eq.s32.totalorder %s22, 0
      %p126 = por %p124, %p125
      %s128 = sadd.s32 %s127, 1
      %p131 = scmp.eq.s32.totalorder %s16, 1
      %p132 = scmp.ne.s32.totalorder %s127, %s129
      %p133 = scmp.eq.s32.totalorder %s16, 0
      %p134 = por %p132, %p133
      %p135 = scmp.ne.s32.totalorder %s127, %s129
      %p136 = scmp.eq.s32.totalorder %s21, 1
      %p137 = por %p135, %p136
      %p138 = scmp.ne.s32.totalorder %s129, %s130
      %p139 = scmp.eq.s32.totalorder %s21, 0
      %p140 = por %p138, %p139
      %p141 = scmp.ne.s32.totalorder %s129, %s130
      %p142 = scmp.eq.s32.totalorder %s22, 1
      %p143 = por %p141, %p142
      %p145 = scmp.ne.s32.totalorder %s130, %s144
      %p146 = scmp.eq.s32.totalorder %s22, 0
      %p147 = por %p145, %p146
      %s149 = sadd.s32 %s148, 1
      %p152 = scmp.eq.s32.totalorder %s16, 1
      %p153 = scmp.ne.s32.totalorder %s148, %s150
      %p154 = scmp.eq.s32.totalorder %s16, 0
      %p155 = por %p153, %p154
      %p156 = scmp.ne.s32.totalorder %s148, %s150
      %p157 = scmp.eq.s32.totalorder %s21, 1
      %p158 = por %p156, %p157
      %p159 = scmp.ne.s32.totalorder %s150, %s151
      %p160 = scmp.eq.s32.totalorder %s21, 0
      %p161 = por %p159, %p160
      %p162 = scmp.ne.s32.totalorder %s150, %s151
      %p163 = scmp.eq.s32.totalorder %s22, 1
      %p164 = por %p162, %p163
      %p166 = scmp.ne.s32.totalorder %s151, %s165
      %p167 = scmp.eq.s32.totalorder %s22, 0
      %p168 = por %p166, %p167
      %s170 = sadd.s32 %s169, 1
      %p173 = scmp.eq.s32.totalorder %s16, 1
      %p174 = scmp.ne.s32.totalorder %s169, %s171
      %p175 = scmp.eq.s32.totalorder %s16, 0
      %p176 = por %p174, %p175
      %p177 = scmp.ne.s32.totalorder %s169, %s171
      %p178 = scmp.eq.s32.totalorder %s21, 1
      %p179 = por %p177, %p178
      %p180 = scmp.ne.s32.totalorder %s171, %s172
      %p181 = scmp.eq.s32.totalorder %s21, 0
      %p182 = por %p180, %p181
      %p183 = scmp.ne.s32.totalorder %s171, %s172
      %p184 = scmp.eq.s32.totalorder %s22, 1
      %p185 = por %p183, %p184
      %p187 = scmp.ne.s32.totalorder %s172, %s186
      %p188 = scmp.eq.s32.totalorder %s22, 0
      %p189 = por %p187, %p188
      %s190 = ssub.s32 %s23, %s35
      %s191 = ssub.s32 %s24, %s31
      %s192 = sor.u32 %s190, %s191
      %p193 = scmp.eq.s32.totalorder %s192, 0
      %s195 = sadd.s32 %s194, 1
      %s196 = scalar_select %p193, %s194, %s195
      %p199 = pneg %p193
      %p200 = scmp.eq.s32.totalorder %s16, 1
      %p201 = por %p199, %p200
      %p202 = scmp.ne.s32.totalorder %s194, %s197
      %p203 = scmp.eq.s32.totalorder %s16, 0
      %p204 = por %p202, %p203
      %p205 = scmp.ne.s32.totalorder %s194, %s197
      %p206 = scmp.eq.s32.totalorder %s21, 1
      %p207 = por %p205, %p206
      %p208 = scmp.ne.s32.totalorder %s197, %s198
      %p209 = scmp.eq.s32.totalorder %s21, 0
      %p210 = por %p208, %p209
      %p211 = scmp.ne.s32.totalorder %s197, %s198
      %p212 = scmp.eq.s32.totalorder %s22, 1
      %p213 = por %p211, %p212
      %p215 = scmp.ne.s32.totalorder %s198, %s214
      %p216 = scmp.eq.s32.totalorder %s22, 0
      %p217 = por %p215, %p216
      %p218 = scmp.le.s32.totalorder 1, %s16
      %p219 = scmp.lt.s32.totalorder %s16, 3
      %p220 = pnand %p218, %p219
      %p221 = pneg %p220
      // Predicated region
      $region9: #{tpu_custom_call.1} parent=5 // pred_check
        _
      $region10: #{tpu_custom_call.1} parent=5 // pred_check_branch
        %223 = sbr.rel (%p220) target = $region12
      $region11: #{tpu_custom_call.1} parent=5 // pred_region
        %s224 = ssub.s32 %s16, 1
        // Predicated region
        $region13: #{tpu_custom_call.1} parent=11 // pred_check
          %p225 = pneg %p77
        $region14: #{tpu_custom_call.1} parent=11 // pred_check_branch
          %227 = sbr.rel (%p225) target = $region16
        $region15: #{tpu_custom_call.1} parent=11 // pred_region
          _
        $region16: #{tpu_custom_call.1} parent=11 // pred_fallthru
          _
        // Predicated region
        $region17: #{tpu_custom_call.1} parent=11 // pred_check
          %p228 = pneg %p98
        $region18: #{tpu_custom_call.1} parent=11 // pred_check_branch
          %230 = sbr.rel (%p228) target = $region20
        $region19: #{tpu_custom_call.1} parent=11 // pred_region
          _
        $region20: #{tpu_custom_call.1} parent=11 // pred_fallthru
          _
        // Predicated region
        $region21: #{tpu_custom_call.1} parent=11 // pred_check
          %p231 = pneg %p119
        $region22: #{tpu_custom_call.1} parent=11 // pred_check_branch
          %233 = sbr.rel (%p231) target = $region24
        $region23: #{tpu_custom_call.1} parent=11 // pred_region
          _
        $region24: #{tpu_custom_call.1} parent=11 // pred_fallthru
          _
        // Predicated region
        $region25: #{tpu_custom_call.1} parent=11 // pred_check
          %p234 = pneg %p140
        $region26: #{tpu_custom_call.1} parent=11 // pred_check_branch
          %236 = sbr.rel (%p234) target = $region28
        $region27: #{tpu_custom_call.1} parent=11 // pred_region
          _
        $region28: #{tpu_custom_call.1} parent=11 // pred_fallthru
          _
        // Predicated region
        $region29: #{tpu_custom_call.1} parent=11 // pred_check
          %p237 = pneg %p161
        $region30: #{tpu_custom_call.1} parent=11 // pred_check_branch
          %239 = sbr.rel (%p237) target = $region32
        $region31: #{tpu_custom_call.1} parent=11 // pred_region
          _
        $region32: #{tpu_custom_call.1} parent=11 // pred_fallthru
          _
        // Predicated region
        $region33: #{tpu_custom_call.1} parent=11 // pred_check
          %p240 = pneg %p182
        $region34: #{tpu_custom_call.1} parent=11 // pred_check_branch
          %242 = sbr.rel (%p240) target = $region36
        $region35: #{tpu_custom_call.1} parent=11 // pred_region
          _
        $region36: #{tpu_custom_call.1} parent=11 // pred_fallthru
          _
      $region12: #{tpu_custom_call.1} parent=5 // pred_fallthru
        _
      %p243 = scmp.lt.s32.totalorder %s16, 2
      // Predicated region
      $region37: #{tpu_custom_call.1} parent=5 // pred_check
        %p244 = pneg %p243
      $region38: #{tpu_custom_call.1} parent=5 // pred_check_branch
        %246 = sbr.rel (%p244) target = $region40
      $region39: #{tpu_custom_call.1} parent=5 // pred_region
        // Predicated region
        $region41: #{tpu_custom_call.1} parent=39 // pred_check
          %p247 = pneg %p50
        $region42: #{tpu_custom_call.1} parent=39 // pred_check_branch
          %249 = sbr.rel (%p247) target = $region44
        $region43: #{tpu_custom_call.1} parent=39 // pred_region
          %s250 = smul.u32 2, %s24
          %p251 = scmp.lt.s32.totalorder %s23, 1
          %s252 = scalar_select %p251, %s23, 1
          %p253 = scmp.lt.s32.totalorder %s250, 1
          %s254 = scalar_select %p253, %s250, 1
          %s255 = smul.addr %s252, 2
          %s256 = sadd.s32 %s254, %s255
          %s257 = smul.addr %s256, 8
          %s258 = scalar_lea.vmem %s0, %s257
          %s259 = smul.u32 2, %s24
        $region44: #{tpu_custom_call.1} parent=39 // pred_fallthru
          _
      $region40: #{tpu_custom_call.1} parent=5 // pred_fallthru
        _
      %p260 = scmp.le.s32.totalorder 1, %s16
      %p261 = scmp.lt.s32.totalorder %s16, 3
      %p262 = pnand %p260, %p261
      %p263 = pneg %p262
      // Predicated region
      $region45: #{tpu_custom_call.1} parent=5 // pred_check
        _
      $region46: #{tpu_custom_call.1} parent=5 // pred_check_branch
        %265 = sbr.rel (%p262) target = $region48
      $region47: #{tpu_custom_call.1} parent=5 // pred_region
        %s266 = ssub.s32 %s16, 1
        %s267 = smul.u32 2, %s26
        %p268 = scmp.lt.s32.totalorder %s25, 1
        %s269 = scalar_select %p268, %s25, 1
        %p270 = scmp.lt.s32.totalorder %s267, 1
        %s271 = scalar_select %p270, %s267, 1
        %s272 = smul.addr %s269, 2
        %s273 = sadd.s32 %s271, %s272
        %s274 = smul.addr %s273, 8
        %s275 = scalar_lea.vmem %s0, %s274
        %p276 = pneg %p56
        %p277 = pneg %p53
        %p278 = pneg %p77
        %p279 = pneg %p74
        %p280 = pneg %p98
        %p281 = pneg %p95
        %p282 = pneg %p119
        %p283 = pneg %p116
        %p284 = pneg %p140
        %p285 = pneg %p137
        %p286 = pneg %p161
        %p287 = pneg %p158
        %p288 = pneg %p182
        %p289 = pneg %p179
        %p290 = pneg %p210
        %p291 = pneg %p207
        %s292 = sand.u32 %s197, 1
        %s293 = scalar_lea.sflag [#allocation3], %s292
        %s294 = sand.u32 %s197, 1
        %s295 = smul.addr %s294, 128
        %s296 = scalar_lea.vmem [#allocation2], %s295
        %s297 = smul.u32 2, %s26
        %p298 = scmp.lt.s32.totalorder %s25, 1
        %s299 = scalar_select %p298, %s25, 1
        %p300 = scmp.lt.s32.totalorder %s297, 1
        %s301 = scalar_select %p300, %s297, 1
        %s302 = smul.addr %s299, 2
        %s303 = sadd.s32 %s301, %s302
        %s304 = smul.addr %s303, 8
        %s305 = scalar_lea.vmem %s0, %s304
        %s306 = smul.u32 2, %s26
        %s307 = smul.u32 2, %s26
        %v308 = vld [vmem:[%s305] sm:$0x1f]
        %v309 = vld [vmem:[%s305 + $0x8] sm:$0x1f]
        %v310 = vld [vmem:[%s1] sm:$0xff]
        %v311 = vld [vmem:[%s1 + $0x8] sm:$0xff]
        %v312 = vld [vmem:[%s1 + $0x10] sm:$0xff]
        %v313 = vld [vmem:[%s1 + $0x18] sm:$0xff]
        %v314 = vld [vmem:[%s2] sm:$0xff]
        %v315 = vld [vmem:[%s2 + $0x8] sm:$0xff]
        %v316 = vld [vmem:[%s2 + $0x10] sm:$0xff]
        %v317 = vld [vmem:[%s2 + $0x18] sm:$0xff]
        %319 = vset.pattern.permute.xlu0 0
        %320 = vperm.xlu0 %319, %v314
        %v321 = vpop.permute.xlu0 %320
        %324 = vset.pattern.permute.xlu0 0
        %325 = vperm.xlu0 %324, %v315
        %v326 = vpop.permute.xlu0 %325
        %329 = vset.pattern.permute.xlu0 0
        %330 = vperm.xlu0 %329, %v316
        %v331 = vpop.permute.xlu0 %330
        %334 = vset.pattern.permute.xlu0 0
        %335 = vperm.xlu0 %334, %v317
        %v336 = vpop.permute.xlu0 %335
        %vm338 = vcmask 39936
        %v340 = vsel %vm338, %v310, 0
        %v343 = vsel %vm338, %v311, 0
        %v346 = vsel %vm338, %v312, 0
        %v349 = vsel %vm338, %v313, 0
        %vm351 = vcmask 1044480
        %v353 = vsel %vm351, %v308, 0
        %v356 = vsel %vm351, %v309, 0
        %358 = vmatprep.subr.mxu0 %v356
        %359 = vmatpush1.msra.mxu0 %v353
        %360 = vmatprep.subr.mxu0 0.0
        %361 = vmatpush1.msra.mxu0 0.0
        %362 = vmatprep.subr.mxu0 0.0
        %363 = vmatpush1.msra.mxu0 0.0
        %364 = vmatprep.subr.mxu0 0.0
        %365 = vmatpush1.msra.mxu0 0.0
        %366 = vmatprep.subr.mxu0 0.0
        %367 = vmatpush1.msra.mxu0 0.0
        %368 = vmatprep.subr.mxu0 0.0
        %369 = vmatpush1.msra.mxu0 0.0
        %370 = vmatprep.subr.mxu0 0.0
        %371 = vmatpush1.msra.mxu0 0.0
        %372 = vmatprep.subr.mxu0 0.0
        %373 = vmatpush1.msra.mxu0 0.0
        %374 = vmatprep.subr.mxu0 0.0
        %375 = vmatpush1.msra.mxu0 0.0
        %376 = vmatprep.subr.mxu0 0.0
        %377 = vmatpush1.msra.mxu0 0.0
        %378 = vmatprep.subr.mxu0 0.0
        %379 = vmatpush1.msra.mxu0 0.0
        %380 = vmatprep.subr.mxu0 0.0
        %381 = vmatpush1.msra.mxu0 0.0
        %382 = vmatprep.subr.mxu0 0.0
        %383 = vmatpush1.msra.mxu0 0.0
        %384 = vmatprep.subr.mxu0 0.0
        %385 = vmatpush1.msra.mxu0 0.0
        %386 = vmatprep.subr.mxu0 0.0
        %387 = vmatpush1.msra.mxu0 0.0
        %388 = vmatprep.subr.mxu0 0.0
        %389 = vmatpush1.msra.mxu0 0.0
        %390 = vmatprep.subr.mxu0 0.0
        %391 = vmatpush1.msra.mxu0 0.0
        %392 = vmatprep.subr.mxu0 0.0
        %393 = vmatpush1.msra.mxu0 0.0
        %394 = vmatprep.subr.mxu0 0.0
        %395 = vmatpush1.msra.mxu0 0.0
        %396 = vmatprep.subr.mxu0 0.0
        %397 = vmatpush1.msra.mxu0 0.0
        %398 = vmatprep.subr.mxu0 0.0
        %399 = vmatpush1.msra.mxu0 0.0
        %400 = vmatprep.subr.mxu0 0.0
        %401 = vmatpush1.msra.mxu0 0.0
        %402 = vmatprep.subr.mxu0 0.0
        %403 = vmatpush1.msra.mxu0 0.0
        %404 = vmatprep.subr.mxu0 0.0
        %405 = vmatpush1.msra.mxu0 0.0
        %406 = vmatprep.subr.mxu0 0.0
        %407 = vmatpush1.msra.mxu0 0.0
        %408 = vmatprep.subr.mxu0 0.0
        %409 = vmatpush1.msra.mxu0 0.0
        %410 = vmatprep.subr.mxu0 0.0
        %411 = vmatpush1.msra.mxu0 0.0
        %412 = vmatprep.subr.mxu0 0.0
        %413 = vmatpush1.msra.mxu0 0.0
        %414 = vmatprep.subr.mxu0 0.0
        %415 = vmatpush1.msra.mxu0 0.0
        %416 = vmatprep.subr.mxu0 0.0
        %417 = vmatpush1.msra.mxu0 0.0
        %418 = vmatprep.subr.mxu0 0.0
        %419 = vmatpush1.msra.mxu0 0.0
        %420 = vmatprep.subr.mxu0 0.0
        %421 = vmatpush1.msra.mxu0 0.0
        %422 = vmatprep.mubr.f32.mxu0 0.0
        %423 = vmatmul.mubr.f32.gmra.mrb[0].mxu0 %v340
        %v424 = vpop.f32.mrb[0].mxu0
        %v425 = vadd.f32 %v321, %v424
        %v426 = vpop.f32.mrb[0].mxu0
        %v427 = vadd.f32 %v321, %v426
        %428 = vmatprep.mubr.f32.mxu0 0.0
        %429 = vmatmul.mubr.f32.gmra.mrb[0].mxu0 %v343
        %v430 = vpop.f32.mrb[0].mxu0
        %v431 = vadd.f32 %v326, %v430
        %v432 = vpop.f32.mrb[0].mxu0
        %v433 = vadd.f32 %v326, %v432
        %434 = vmatprep.mubr.f32.mxu0 0.0
        %435 = vmatmul.mubr.f32.gmra.mrb[0].mxu0 %v346
        %v436 = vpop.f32.mrb[0].mxu0
        %v437 = vadd.f32 %v331, %v436
        %v438 = vpop.f32.mrb[0].mxu0
        %v439 = vadd.f32 %v331, %v438
        %440 = vmatprep.mubr.f32.mxu0 0.0
        %441 = vmatmul.mubr.f32.gmra.mrb[0].mxu0 %v349
        %v442 = vpop.f32.mrb[0].mxu0
        %v443 = vadd.f32 %v336, %v442
        %v444 = vpop.f32.mrb[0].mxu0
        %v445 = vadd.f32 %v336, %v444
        %446 = vdwg.mxu0
        %v447 = vmax.f32 %v425, 0.0
        %v448 = vmax.f32 %v427, 0.0
        %v449 = vmax.f32 %v431, 0.0
        %v450 = vmax.f32 %v433, 0.0
        %v451 = vmax.f32 %v437, 0.0
        %v452 = vmax.f32 %v439, 0.0
        %v453 = vmax.f32 %v443, 0.0
        %v454 = vmax.f32 %v445, 0.0
        %v455 = vld [vmem:[%s3] sm:$0xff]
        %v456 = vld [vmem:[%s3 + $0x8] sm:$0xff]
        %v457 = vld [vmem:[%s3 + $0x10] sm:$0xff]
        %v458 = vld [vmem:[%s3 + $0x18] sm:$0xff]
        %v459 = vld [vmem:[%s3 + $0x20] sm:$0xff]
        %v460 = vld [vmem:[%s3 + $0x28] sm:$0xff]
        %v461 = vld [vmem:[%s3 + $0x30] sm:$0xff]
        %v462 = vld [vmem:[%s3 + $0x38] sm:$0xff]
        %v463 = vld [vmem:[%s4] sm:$0xff]
        %v464 = vld [vmem:[%s4 + $0x8] sm:$0xff]
        %v465 = vld [vmem:[%s4 + $0x10] sm:$0xff]
        %v466 = vld [vmem:[%s4 + $0x18] sm:$0xff]
        %v467 = vld [vmem:[%s4 + $0x20] sm:$0xff]
        %v468 = vld [vmem:[%s4 + $0x28] sm:$0xff]
        %v469 = vld [vmem:[%s4 + $0x30] sm:$0xff]
        %v470 = vld [vmem:[%s4 + $0x38] sm:$0xff]
        %472 = vset.pattern.permute.xlu0 0
        %473 = vperm.xlu0 %472, %v463
        %v474 = vpop.permute.xlu0 %473
        %477 = vset.pattern.permute.xlu0 0
        %478 = vperm.xlu0 %477, %v464
        %v479 = vpop.permute.xlu0 %478
        %482 = vset.pattern.permute.xlu0 0
        %483 = vperm.xlu0 %482, %v465
        %v484 = vpop.permute.xlu0 %483
        %487 = vset.pattern.permute.xlu0 0
        %488 = vperm.xlu0 %487, %v466
        %v489 = vpop.permute.xlu0 %488
        %492 = vset.pattern.permute.xlu0 0
        %493 = vperm.xlu0 %492, %v467
        %v494 = vpop.permute.xlu0 %493
        %497 = vset.pattern.permute.xlu0 0
        %498 = vperm.xlu0 %497, %v468
        %v499 = vpop.permute.xlu0 %498
        %502 = vset.pattern.permute.xlu0 0
        %503 = vperm.xlu0 %502, %v469
        %v504 = vpop.permute.xlu0 %503
        %507 = vset.pattern.permute.xlu0 0
        %508 = vperm.xlu0 %507, %v470
        %v509 = vpop.permute.xlu0 %508
        %vm511 = vcmask 261120
        %v513 = vsel %vm511, %v455, 0
        %v516 = vsel %vm511, %v456, 0
        %v519 = vsel %vm511, %v457, 0
        %v522 = vsel %vm511, %v458, 0
        %v525 = vsel %vm511, %v459, 0
        %v528 = vsel %vm511, %v460, 0
        %v531 = vsel %vm511, %v461, 0
        %v534 = vsel %vm511, %v462, 0
        %536 = vmatprep.subr.mxu0 %v448
        %537 = vmatpush1.msra.mxu0 %v447
        %538 = vmatprep.subr.mxu0 %v450
        %539 = vmatpush1.msra.mxu0 %v449
        %540 = vmatprep.subr.mxu0 %v452
        %541 = vmatpush1.msra.mxu0 %v451
        %542 = vmatprep.subr.mxu0 %v454
        %543 = vmatpush1.msra.mxu0 %v453
        %544 = vmatprep.subr.mxu0 0.0
        %545 = vmatpush1.msra.mxu0 0.0
        %546 = vmatprep.subr.mxu0 0.0
        %547 = vmatpush1.msra.mxu0 0.0
        %548 = vmatprep.subr.mxu0 0.0
        %549 = vmatpush1.msra.mxu0 0.0
        %550 = vmatprep.subr.mxu0 0.0
        %551 = vmatpush1.msra.mxu0 0.0
        %552 = vmatprep.subr.mxu0 0.0
        %553 = vmatpush1.msra.mxu0 0.0
        %554 = vmatprep.subr.mxu0 0.0
        %555 = vmatpush1.msra.mxu0 0.0
        %556 = vmatprep.subr.mxu0 0.0
        %557 = vmatpush1.msra.mxu0 0.0
        %558 = vmatprep.subr.mxu0 0.0
        %559 = vmatpush1.msra.mxu0 0.0
        %560 = vmatprep.subr.mxu0 0.0
        %561 = vmatpush1.msra.mxu0 0.0
        %562 = vmatprep.subr.mxu0 0.0
        %563 = vmatpush1.msra.mxu0 0.0
        %564 = vmatprep.subr.mxu0 0.0
        %565 = vmatpush1.msra.mxu0 0.0
        %566 = vmatprep.subr.mxu0 0.0
        %567 = vmatpush1.msra.mxu0 0.0
        %568 = vmatprep.subr.mxu0 0.0
        %569 = vmatpush1.msra.mxu0 0.0
        %570 = vmatprep.subr.mxu0 0.0
        %571 = vmatpush1.msra.mxu0 0.0
        %572 = vmatprep.subr.mxu0 0.0
        %573 = vmatpush1.msra.mxu0 0.0
        %574 = vmatprep.subr.mxu0 0.0
        %575 = vmatpush1.msra.mxu0 0.0
        %576 = vmatprep.subr.mxu0 0.0
        %577 = vmatpush1.msra.mxu0 0.0
        %578 = vmatprep.subr.mxu0 0.0
        %579 = vmatpush1.msra.mxu0 0.0
        %580 = vmatprep.subr.mxu0 0.0
        %581 = vmatpush1.msra.mxu0 0.0
        %582 = vmatprep.subr.mxu0 0.0
        %583 = vmatpush1.msra.mxu0 0.0
        %584 = vmatprep.subr.mxu0 0.0
        %585 = vmatpush1.msra.mxu0 0.0
        %586 = vmatprep.subr.mxu0 0.0
        %587 = vmatpush1.msra.mxu0 0.0
        %588 = vmatprep.subr.mxu0 0.0
        %589 = vmatpush1.msra.mxu0 0.0
        %590 = vmatprep.subr.mxu0 0.0
        %591 = vmatpush1.msra.mxu0 0.0
        %592 = vmatprep.subr.mxu0 0.0
        %593 = vmatpush1.msra.mxu0 0.0
        %594 = vmatprep.subr.mxu0 0.0
        %595 = vmatpush1.msra.mxu0 0.0
        %596 = vmatprep.subr.mxu0 0.0
        %597 = vmatpush1.msra.mxu0 0.0
        %598 = vmatprep.subr.mxu0 0.0
        %599 = vmatpush1.msra.mxu0 0.0
        %600 = vmatprep.mubr.f32.mxu0 0.0
        %601 = vmatmul.mubr.f32.gmra.mrb[0].mxu0 %v513
        %v602 = vpop.f32.mrb[0].mxu0
        %v603 = vadd.f32 %v474, %v602
        %v604 = vpop.f32.mrb[0].mxu0
        %v605 = vadd.f32 %v474, %v604
        %606 = vmatprep.mubr.f32.mxu0 0.0
        %607 = vmatmul.mubr.f32.gmra.mrb[0].mxu0 %v516
        %v608 = vpop.f32.mrb[0].mxu0
        %v609 = vadd.f32 %v479, %v608
        %v610 = vpop.f32.mrb[0].mxu0
        %v611 = vadd.f32 %v479, %v610
        %612 = vmatprep.mubr.f32.mxu0 0.0
        %613 = vmatmul.mubr.f32.gmra.mrb[0].mxu0 %v519
        %v614 = vpop.f32.mrb[0].mxu0
        %v615 = vadd.f32 %v484, %v614
        %v616 = vpop.f32.mrb[0].mxu0
        %v617 = vadd.f32 %v484, %v616
        %618 = vmatprep.mubr.f32.mxu0 0.0
        %619 = vmatmul.mubr.f32.gmra.mrb[0].mxu0 %v522
        %v620 = vpop.f32.mrb[0].mxu0
        %v621 = vadd.f32 %v489, %v620
        %v622 = vpop.f32.mrb[0].mxu0
        %v623 = vadd.f32 %v489, %v622
        %624 = vmatprep.mubr.f32.mxu0 0.0
        %625 = vmatmul.mubr.f32.gmra.mrb[0].mxu0 %v525
        %v626 = vpop.f32.mrb[0].mxu0
        %v627 = vadd.f32 %v494, %v626
        %v628 = vpop.f32.mrb[0].mxu0
        %v629 = vadd.f32 %v494, %v628
        %630 = vmatprep.mubr.f32.mxu0 0.0
        %631 = vmatmul.mubr.f32.gmra.mrb[0].mxu0 %v528
        %v632 = vpop.f32.mrb[0].mxu0
        %v633 = vadd.f32 %v499, %v632
        %v634 = vpop.f32.mrb[0].mxu0
        %v635 = vadd.f32 %v499, %v634
        %636 = vmatprep.mubr.f32.mxu0 0.0
        %637 = vmatmul.mubr.f32.gmra.mrb[0].mxu0 %v531
        %v638 = vpop.f32.mrb[0].mxu0
        %v639 = vadd.f32 %v504, %v638
        %v640 = vpop.f32.mrb[0].mxu0
        %v641 = vadd.f32 %v504, %v640
        %642 = vmatprep.mubr.f32.mxu0 0.0
        %643 = vmatmul.mubr.f32.gmra.mrb[0].mxu0 %v534
        %v644 = vpop.f32.mrb[0].mxu0
        %v645 = vadd.f32 %v509, %v644
        %v646 = vpop.f32.mrb[0].mxu0
        %v647 = vadd.f32 %v509, %v646
        %648 = vdwg.mxu0
        %v649 = vmax.f32 %v603, 0.0
        %v650 = vmax.f32 %v605, 0.0
        %v651 = vmax.f32 %v609, 0.0
        %v652 = vmax.f32 %v611, 0.0
        %v653 = vmax.f32 %v615, 0.0
        %v654 = vmax.f32 %v617, 0.0
        %v655 = vmax.f32 %v621, 0.0
        %v656 = vmax.f32 %v623, 0.0
        %v657 = vmax.f32 %v627, 0.0
        %v658 = vmax.f32 %v629, 0.0
        %v659 = vmax.f32 %v633, 0.0
        %v660 = vmax.f32 %v635, 0.0
        %v661 = vmax.f32 %v639, 0.0
        %v662 = vmax.f32 %v641, 0.0
        %v663 = vmax.f32 %v645, 0.0
        %v664 = vmax.f32 %v647, 0.0
        %v665 = vld [vmem:[%s5] sm:$0xff]
        %v666 = vld [vmem:[%s5 + $0x8] sm:$0xff]
        %v667 = vld [vmem:[%s5 + $0x10] sm:$0xff]
        %v668 = vld [vmem:[%s5 + $0x18] sm:$0xff]
        %v669 = vld [vmem:[%s5 + $0x20] sm:$0xff]
        %v670 = vld [vmem:[%s5 + $0x28] sm:$0xff]
        %v671 = vld [vmem:[%s5 + $0x30] sm:$0xff]
        %v672 = vld [vmem:[%s5 + $0x38] sm:$0xff]
        %v673 = vld [vmem:[%s6] sm:$0xff]
        %v674 = vld [vmem:[%s6 + $0x8] sm:$0xff]
        %v675 = vld [vmem:[%s6 + $0x10] sm:$0xff]
        %v676 = vld [vmem:[%s6 + $0x18] sm:$0xff]
        %v677 = vld [vmem:[%s6 + $0x20] sm:$0xff]
        %v678 = vld [vmem:[%s6 + $0x28] sm:$0xff]
        %v679 = vld [vmem:[%s6 + $0x30] sm:$0xff]
        %v680 = vld [vmem:[%s6 + $0x38] sm:$0xff]
        %682 = vset.pattern.permute.xlu0 0
        %683 = vperm.xlu0 %682, %v673
        %v684 = vpop.permute.xlu0 %683
        %687 = vset.pattern.permute.xlu0 0
        %688 = vperm.xlu0 %687, %v674
        %v689 = vpop.permute.xlu0 %688
        %692 = vset.pattern.permute.xlu0 0
        %693 = vperm.xlu0 %692, %v675
        %v694 = vpop.permute.xlu0 %693
        %697 = vset.pattern.permute.xlu0 0
        %698 = vperm.xlu0 %697, %v676
        %v699 = vpop.permute.xlu0 %698
        %702 = vset.pattern.permute.xlu0 0
        %703 = vperm.xlu0 %702, %v677
        %v704 = vpop.permute.xlu0 %703
        %707 = vset.pattern.permute.xlu0 0
        %708 = vperm.xlu0 %707, %v678
        %v709 = vpop.permute.xlu0 %708
        %712 = vset.pattern.permute.xlu0 0
        %713 = vperm.xlu0 %712, %v679
        %v714 = vpop.permute.xlu0 %713
        %717 = vset.pattern.permute.xlu0 0
        %718 = vperm.xlu0 %717, %v680
        %v719 = vpop.permute.xlu0 %718
        %vm721 = vcmask 523264
        %v723 = vsel %vm721, %v665, 0
        %v726 = vsel %vm721, %v666, 0
        %v729 = vsel %vm721, %v667, 0
        %v732 = vsel %vm721, %v668, 0
        %v735 = vsel %vm721, %v669, 0
        %v738 = vsel %vm721, %v670, 0
        %v741 = vsel %vm721, %v671, 0
        %v744 = vsel %vm721, %v672, 0
        %746 = vmatprep.subr.mxu0 %v650
        %747 = vmatpush1.msra.mxu0 %v649
        %748 = vmatprep.subr.mxu0 %v652
        %749 = vmatpush1.msra.mxu0 %v651
        %750 = vmatprep.subr.mxu0 %v654
        %751 = vmatpush1.msra.mxu0 %v653
        %752 = vmatprep.subr.mxu0 %v656
        %753 = vmatpush1.msra.mxu0 %v655
        %754 = vmatprep.subr.mxu0 %v658
        %755 = vmatpush1.msra.mxu0 %v657
        %756 = vmatprep.subr.mxu0 %v660
        %757 = vmatpush1.msra.mxu0 %v659
        %758 = vmatprep.subr.mxu0 %v662
        %759 = vmatpush1.msra.mxu0 %v661
        %760 = vmatprep.subr.mxu0 %v664
        %761 = vmatpush1.msra.mxu0 %v663
        %762 = vmatprep.subr.mxu0 0.0
        %763 = vmatpush1.msra.mxu0 0.0
        %764 = vmatprep.subr.mxu0 0.0
        %765 = vmatpush1.msra.mxu0 0.0
        %766 = vmatprep.subr.mxu0 0.0
        %767 = vmatpush1.msra.mxu0 0.0
        %768 = vmatprep.subr.mxu0 0.0
        %769 = vmatpush1.msra.mxu0 0.0
        %770 = vmatprep.subr.mxu0 0.0
        %771 = vmatpush1.msra.mxu0 0.0
        %772 = vmatprep.subr.mxu0 0.0
        %773 = vmatpush1.msra.mxu0 0.0
        %774 = vmatprep.subr.mxu0 0.0
        %775 = vmatpush1.msra.mxu0 0.0
        %776 = vmatprep.subr.mxu0 0.0
        %777 = vmatpush1.msra.mxu0 0.0
        %778 = vmatprep.subr.mxu0 0.0
        %779 = vmatpush1.msra.mxu0 0.0
        %780 = vmatprep.subr.mxu0 0.0
        %781 = vmatpush1.msra.mxu0 0.0
        %782 = vmatprep.subr.mxu0 0.0
        %783 = vmatpush1.msra.mxu0 0.0
        %784 = vmatprep.subr.mxu0 0.0
        %785 = vmatpush1.msra.mxu0 0.0
        %786 = vmatprep.subr.mxu0 0.0
        %787 = vmatpush1.msra.mxu0 0.0
        %788 = vmatprep.subr.mxu0 0.0
        %789 = vmatpush1.msra.mxu0 0.0
        %790 = vmatprep.subr.mxu0 0.0
        %791 = vmatpush1.msra.mxu0 0.0
        %792 = vmatprep.subr.mxu0 0.0
        %793 = vmatpush1.msra.mxu0 0.0
        %794 = vmatprep.subr.mxu0 0.0
        %795 = vmatpush1.msra.mxu0 0.0
        %796 = vmatprep.subr.mxu0 0.0
        %797 = vmatpush1.msra.mxu0 0.0
        %798 = vmatprep.subr.mxu0 0.0
        %799 = vmatpush1.msra.mxu0 0.0
        %800 = vmatprep.subr.mxu0 0.0
        %801 = vmatpush1.msra.mxu0 0.0
        %802 = vmatprep.subr.mxu0 0.0
        %803 = vmatpush1.msra.mxu0 0.0
        %804 = vmatprep.subr.mxu0 0.0
        %805 = vmatpush1.msra.mxu0 0.0
        %806 = vmatprep.subr.mxu0 0.0
        %807 = vmatpush1.msra.mxu0 0.0
        %808 = vmatprep.subr.mxu0 0.0
        %809 = vmatpush1.msra.mxu0 0.0
        %810 = vmatprep.mubr.f32.mxu0 0.0
        %811 = vmatmul.mubr.f32.gmra.mrb[0].mxu0 %v723
        %v812 = vpop.f32.mrb[0].mxu0
        %v813 = vadd.f32 %v684, %v812
        %v814 = vpop.f32.mrb[0].mxu0
        %v815 = vadd.f32 %v684, %v814
        %816 = vmatprep.mubr.f32.mxu0 0.0
        %817 = vmatmul.mubr.f32.gmra.mrb[0].mxu0 %v726
        %v818 = vpop.f32.mrb[0].mxu0
        %v819 = vadd.f32 %v689, %v818
        %v820 = vpop.f32.mrb[0].mxu0
        %v821 = vadd.f32 %v689, %v820
        %822 = vmatprep.mubr.f32.mxu0 0.0
        %823 = vmatmul.mubr.f32.gmra.mrb[0].mxu0 %v729
        %v824 = vpop.f32.mrb[0].mxu0
        %v825 = vadd.f32 %v694, %v824
        %v826 = vpop.f32.mrb[0].mxu0
        %v827 = vadd.f32 %v694, %v826
        %828 = vmatprep.mubr.f32.mxu0 0.0
        %829 = vmatmul.mubr.f32.gmra.mrb[0].mxu0 %v732
        %v830 = vpop.f32.mrb[0].mxu0
        %v831 = vadd.f32 %v699, %v830
        %v832 = vpop.f32.mrb[0].mxu0
        %v833 = vadd.f32 %v699, %v832
        %834 = vmatprep.mubr.f32.mxu0 0.0
        %835 = vmatmul.mubr.f32.gmra.mrb[0].mxu0 %v735
        %v836 = vpop.f32.mrb[0].mxu0
        %v837 = vadd.f32 %v704, %v836
        %v838 = vpop.f32.mrb[0].mxu0
        %v839 = vadd.f32 %v704, %v838
        %840 = vmatprep.mubr.f32.mxu0 0.0
        %841 = vmatmul.mubr.f32.gmra.mrb[0].mxu0 %v738
        %v842 = vpop.f32.mrb[0].mxu0
        %v843 = vadd.f32 %v709, %v842
        %v844 = vpop.f32.mrb[0].mxu0
        %v845 = vadd.f32 %v709, %v844
        %846 = vmatprep.mubr.f32.mxu0 0.0
        %847 = vmatmul.mubr.f32.gmra.mrb[0].mxu0 %v741
        %v848 = vpop.f32.mrb[0].mxu0
        %v849 = vadd.f32 %v714, %v848
        %v850 = vpop.f32.mrb[0].mxu0
        %v851 = vadd.f32 %v714, %v850
        %852 = vmatprep.mubr.f32.mxu0 0.0
        %853 = vmatmul.mubr.f32.gmra.mrb[0].mxu0 %v744
        %v854 = vpop.f32.mrb[0].mxu0
        %v855 = vadd.f32 %v719, %v854
        %v856 = vpop.f32.mrb[0].mxu0
        %v857 = vadd.f32 %v719, %v856
        %858 = vdwg.mxu0
        %859 = vst [vmem:[%s296] sm:$0xff] %v813
        %860 = vst [vmem:[%s296 + $0x8] sm:$0xff] %v815
        %861 = vst [vmem:[%s296 + $0x10] sm:$0xff] %v819
        %862 = vst [vmem:[%s296 + $0x18] sm:$0xff] %v821
        %863 = vst [vmem:[%s296 + $0x20] sm:$0xff] %v825
        %864 = vst [vmem:[%s296 + $0x28] sm:$0xff] %v827
        %865 = vst [vmem:[%s296 + $0x30] sm:$0xff] %v831
        %866 = vst [vmem:[%s296 + $0x38] sm:$0xff] %v833
        %867 = vst [vmem:[%s296 + $0x40] sm:$0xff] %v837
        %868 = vst [vmem:[%s296 + $0x48] sm:$0xff] %v839
        %869 = vst [vmem:[%s296 + $0x50] sm:$0xff] %v843
        %870 = vst [vmem:[%s296 + $0x58] sm:$0xff] %v845
        %871 = vst [vmem:[%s296 + $0x60] sm:$0xff] %v849
        %872 = vst [vmem:[%s296 + $0x68] sm:$0xff] %v851
        %873 = vst [vmem:[%s296 + $0x70] sm:$0xff] %v855
        %874 = vst [vmem:[%s296 + $0x78] sm:$0xff] %v857
        %s875 = sand.u32 %s197, 1
        %s876 = scalar_lea.sflag [#allocation3], %s875
        %s877 = sand.u32 %s197, 1
        %s878 = smul.addr %s877, 128
        %s879 = scalar_lea.vmem [#allocation2], %s878
        // Predicated region
        $region49: #{tpu_custom_call.1} parent=47 // pred_check
          %p880 = pneg %p207
        $region50: #{tpu_custom_call.1} parent=47 // pred_check_branch
          %882 = sbr.rel (%p880) target = $region52
        $region51: #{tpu_custom_call.1} parent=47 // pred_region
          %s883 = smul.u32 2, %s26
          %s885 = ssub.s32 2048, 2048
          %886 = vsyncadd %s876, %s885
          %s887 = smul.addr %s25, 16
          %s888 = sadd.s32 %s883, %s887
          %s889 = smul.addr %s888, 128
          %s890 = scalar_lea.hbm %s7, %s889
          %s891 = sshll.u32 %s879, 4
          %s892 = int_to_ptr.vmem [resolvable:$true] %s891
          %897 = dma.vmem_to_hbm [thread:$0]  %s892, 2048, %s890, %s876, 256, 256, 16
        $region52: #{tpu_custom_call.1} parent=47 // pred_fallthru
          _
      $region48: #{tpu_custom_call.1} parent=5 // pred_fallthru
        _
      %p898 = scmp.le.s32.totalorder 2, %s16
      // Predicated region
      $region53: #{tpu_custom_call.1} parent=5 // pred_check
        %p899 = pneg %p898
      $region54: #{tpu_custom_call.1} parent=5 // pred_check_branch
        %901 = sbr.rel (%p899) target = $region56
      $region55: #{tpu_custom_call.1} parent=5 // pred_region
        %s902 = ssub.s32 %s16, 2
        // Predicated region
        $region57: #{tpu_custom_call.1} parent=55 // pred_check
          %p903 = pneg %p213
        $region58: #{tpu_custom_call.1} parent=55 // pred_check_branch
          %905 = sbr.rel (%p903) target = $region60
        $region59: #{tpu_custom_call.1} parent=55 // pred_region
          %s906 = sand.u32 %s198, 1
          %s907 = scalar_lea.sflag [#allocation3], %s906
          %s908 = sand.u32 %s198, 1
          %s909 = smul.addr %s908, 128
          %s910 = scalar_lea.vmem [#allocation2], %s909
          %911 = dma.done %s907, 2048
        $region60: #{tpu_custom_call.1} parent=55 // pred_fallthru
          _
      $region56: #{tpu_custom_call.1} parent=5 // pred_fallthru
        _
    $region6: #{tpu_custom_call.1} parent=1 // loop_footer
      %s20 = sadd.s32 1, %s16
    $region7: #{tpu_custom_call.1} parent=1 // loop_footer_branch
      %15 = sbr.rel target = $region3
    $region8: #{tpu_custom_call.1} parent=1 // loop_exit
      _
    %912 = vsyncpa [#allocation3], 1
    %s913 = scalar_lea.sflag [#allocation3], 1
    %914 = vsyncpa %s913, 1

</llo_original>
